<compile_context>
chip_gen: v5e
topology: v5e:2x2
jax: 0.10.0
libtpu: 0.0.40
codegen_flags: <defaults>
</compile_context>

<pallas_src>
import functools

import jax
import jax.numpy as jnp
from jax import lax
from jax.experimental import pallas as pl
from jax.experimental.pallas import tpu as pltpu


def _fill_padded(x_ref, pad_ref, *, H, W, Hp, Wp, ph, pw, pad_val, hoist_border):
    """Build the spatially padded tile (flat lane layout) in VMEM scratch.

    x_ref:   (BN, C, H*W)    input block, native dtype
    pad_ref: (BN, C, Hp*Wp)  f32 scratch; flat index h*Wp + w == padded (h, w)
    """
    if ph == 0 and pw == 0:
        pad_ref[...] = x_ref[...].astype(pad_ref.dtype)
        return pad_ref[...]

    if hoist_border:
        # Scratch persists across grid steps and this pass runs sequentially
        # ("arbitrary" axis, single core), so the constant border is written once.
        @pl.when(pl.program_id(0) == 0)
        def _():
            pad_ref[...] = jnp.full(pad_ref.shape, pad_val, pad_ref.dtype)
    else:
        # "parallel" axis: on a 2-TC chip the second core starts at a non-zero
        # program_id with a fresh scratch, so refill the (lane-dense) border
        # every step to stay megacore-safe.
        pad_ref[...] = jnp.full(pad_ref.shape, pad_val, pad_ref.dtype)

    if pw == 0:
        # Row pitch unchanged (Wp == W): the interior is one dense copy.
        pad_ref[:, :, pl.ds(ph * Wp, H * W)] = x_ref[...].astype(pad_ref.dtype)
    else:
        # Per-row scatter is the only lane-masked piece left on the input side.
        for h in range(H):
            pad_ref[:, :, pl.ds((ph + h) * Wp + pw, W)] = (
                x_ref[:, :, pl.ds(h * W, W)].astype(pad_ref.dtype))
    return pad_ref[...]


def _pool_flat(xp, *, pool_type, kh, kw, Wp, Lw, L2):
    """Separable pooling on the flat padded tile.

    xp: (BN, C, Hp*Wp).  Returns acc: (BN, C, L2) where acc[.., h*Wp + w] is the
    pooled window whose top-left corner is padded position (h, w).  Only
    positions with h <= Hp-kh and w <= Wp-kw are meaningful; the rest mix
    neighbouring rows and are discarded / masked by the caller.
    """
    bn, c, _ = xp.shape
    combine = jnp.maximum if pool_type == "max" else jnp.add
    # W taps (lane offsets 0..kw-1), stride 1.
    accw = lax.slice(xp, (0, 0, 0), (bn, c, Lw))
    for j in range(1, kw):
        accw = combine(accw, lax.slice(xp, (0, 0, j), (bn, c, j + Lw)))
    # H taps (row offsets 0..kh-1 == lane offsets i*Wp).
    acc = lax.slice(accw, (0, 0, 0), (bn, c, L2))
    for i in range(1, kh):
        acc = combine(acc, lax.slice(accw, (0, 0, i * Wp), (bn, c, i * Wp + L2)))
    return acc


def _extract_rows(acc, *, Ho, Wo, sh, sw, Wp):
    """Yield (ho, (BN, C, Wo)) pooled output rows from the padded-pitch acc."""
    bn, c, _ = acc.shape
    wv = (Wo - 1) * sw + 1
    for ho in range(Ho):
        start = ho * sh * Wp
        row = lax.slice(acc, (0, 0, start), (bn, c, start + wv))
        if sw > 1:
            row = lax.slice(row, (0, 0, 0), (bn, c, wv), (1, 1, sw))
        yield ho, row


def _pool_stats_kernel(x_ref, rcnt_ref, keep_ref, *refs, pool_type, kh, kw,
                       sh, sw, H, W, Hp, Wp, Ho, Wo, ph, pw, pad_val, Lw, L2,
                       emit_pooled, inv_cnt0):
    """Pass 1: pool, accumulate global shifted per-channel sum / sum-of-squares
    (and, for stride > 1, also emit the pooled tensor)."""
    if emit_pooled:
        s1_ref, s2_ref, mu0_ref, pooled_ref, pad_ref = refs
    else:
        s1_ref, s2_ref, mu0_ref, pad_ref = refs
        pooled_ref = None

    xp = _fill_padded(x_ref, pad_ref, H=H, W=W, Hp=Hp, Wp=Wp, ph=ph, pw=pw,
                      pad_val=pad_val, hoist_border=True)
    acc = _pool_flat(xp, pool_type=pool_type, kh=kh, kw=kw, Wp=Wp, Lw=Lw, L2=L2)
    if pool_type == "avg":
        acc = acc * lax.slice(rcnt_ref[...], (0, 0, 0), (1, 1, L2))
    kept = lax.slice(keep_ref[...], (0, 0, 0), (1, 1, L2)) > 0.5

    # Shift-by-first-tile-mean accumulation: mu0 ~= global mean, so the
    # E[x^2] - E[x]^2 epilogue no longer cancels catastrophically.
    @pl.when(pl.program_id(0) == 0)
    def _():
        mu0_ref[...] = jnp.sum(jnp.where(kept, acc, 0.0), axis=(0, 2),
                               keepdims=True) * inv_cnt0
        s1_ref[...] = jnp.zeros_like(s1_ref)
        s2_ref[...] = jnp.zeros_like(s2_ref)

    d = jnp.where(kept, acc - mu0_ref[...], 0.0)
    s1_ref[...] += jnp.sum(d, axis=(0, 2), keepdims=True)
    s2_ref[...] += jnp.sum(d * d, axis=(0, 2), keepdims=True)

    if emit_pooled:
        for ho, row in _extract_rows(acc, Ho=Ho, Wo=Wo, sh=sh, sw=sw, Wp=Wp):
            pooled_ref[:, :, pl.ds(ho * Wo, Wo)] = row.astype(pooled_ref.dtype)


def _pool_affine_kernel(x_ref, rcnt_ref, scale_ref, bias_ref, out_ref, pad_ref,
                        *, pool_type, kh, kw, sh, sw, H, W, Hp, Wp, Ho, Wo,
                        ph, pw, pad_val, Lw, L2):
    """Pass 2 (stride == 1): re-pool the tile and apply the fused BN affine."""
    xp = _fill_padded(x_ref, pad_ref, H=H, W=W, Hp=Hp, Wp=Wp, ph=ph, pw=pw,
                      pad_val=pad_val, hoist_border=False)
    acc = _pool_flat(xp, pool_type=pool_type, kh=kh, kw=kw, Wp=Wp, Lw=Lw, L2=L2)
    if pool_type == "avg":
        acc = acc * lax.slice(rcnt_ref[...], (0, 0, 0), (1, 1, L2))
    # Fused BN scale / bias, applied lane-densely before the strided extraction.
    acc = acc * scale_ref[...] + bias_ref[...]
    for ho, row in _extract_rows(acc, Ho=Ho, Wo=Wo, sh=sh, sw=sw, Wp=Wp):
        out_ref[:, :, pl.ds(ho * Wo, Wo)] = row.astype(out_ref.dtype)


def _affine_kernel(p_ref, scale_ref, bias_ref, out_ref):
    """Pass 2 (stride > 1): trivial lane-dense scale/bias over the pooled slab."""
    out_ref[...] = (p_ref[...].astype(jnp.float32) * scale_ref[...]
                    + bias_ref[...]).astype(out_ref.dtype)


def pool_bn(x_nchw, gamma, beta, *, pool_type, kernel_size, stride, padding,
            eps=1e-5):
    """PoolBN.forward: pool_type in {'max', 'avg'}; input is NCHW (PyTorch)."""
    pool_type = pool_type.lower()
    if pool_type not in ("max", "avg"):
        raise ValueError(pool_type)
    to2 = lambda v: (v, v) if isinstance(v, int) else tuple(v)
    kh, kw = to2(kernel_size)
    sh, sw = to2(stride)
    ph, pw = to2(padding)

    N, C, H, W = x_nchw.shape
    Ho = (H + 2 * ph - kh) // sh + 1
    Wo = (W + 2 * pw - kw) // sw + 1
    Hp, Wp = H + 2 * ph, W + 2 * pw
    HW, HpWp, HoWo = H * W, Hp * Wp, Ho * Wo
    Lw = HpWp - (kw - 1)
    L2 = Lw - (kh - 1) * Wp
    out_dtype = x_nchw.dtype

    # Lane-dense slabs: spatial folded onto the lane axis (free reshape of a
    # contiguous NCHW array).  x keeps its native dtype (no wrapper f32 cast).
    x_flat = x_nchw.reshape(N, C, HW)

    # Per padded-grid-position helper maps, flat (1, 1, Hp*Wp), tiny.
    hh = jnp.arange(HpWp, dtype=jnp.int32) // Wp
    ww = jnp.arange(HpWp, dtype=jnp.int32) % Wp
    if pool_type == "avg":
        # count_include_pad=False divisor: valid-tap count of the window whose
        # top-left corner is padded position (h, w).  Clamp avoids div-by-zero
        # at positions that are never kept.
        cnt_h = jnp.clip(jnp.minimum(hh + kh, ph + H) - jnp.maximum(hh, ph), 1, kh)
        cnt_w = jnp.clip(jnp.minimum(ww + kw, pw + W) - jnp.maximum(ww, pw), 1, kw)
        rcnt = (1.0 / (cnt_h * cnt_w).astype(jnp.float32)).reshape(1, 1, HpWp)
        pad_val = 0.0
    else:
        rcnt = jnp.ones((1, 1, HpWp), jnp.float32)   # unused (static gate)
        pad_val = float("-inf")  # never wins: PyTorch enforces padding <= k/2
    keep = ((hh % sh == 0) & (hh // sh < Ho) & (ww % sw == 0) & (ww // sw < Wo))
    keep = keep.astype(jnp.float32).reshape(1, 1, HpWp)

    # Batch tile: largest divisor of N whose working set fits the VMEM budget.
    xbytes = jnp.dtype(out_dtype).itemsize
    per_n = C * (2 * HW * xbytes + 6 * HpWp * 4 + 4 * HoWo * 4)
    budget = 12 * 1024 * 1024
    BN = 1
    for cand in range(1, N + 1):
        if N % cand == 0 and cand * per_n <= budget:
            BN = cand
    nb = N // BN
    vmem_limit = 48 * 1024 * 1024   # > default scoped limit on v5e/v6e, < v7x phys.

    emit_pooled = (sh * sw) > 1

    common = dict(pool_type=pool_type, kh=kh, kw=kw, sh=sh, sw=sw, H=H, W=W,
                  Hp=Hp, Wp=Wp, Ho=Ho, Wo=Wo, ph=ph, pw=pw, pad_val=pad_val,
                  Lw=Lw, L2=L2)

    x_spec = pl.BlockSpec((BN, C, HW), lambda n: (n, 0, 0))
    map_spec = pl.BlockSpec((1, 1, HpWp), lambda n: (0, 0, 0))
    chan_spec = pl.BlockSpec((1, C, 1), lambda n: (0, 0, 0))
    pooled_spec = pl.BlockSpec((BN, C, HoWo), lambda n: (n, 0, 0))
    pad_scratch = pltpu.VMEM((BN, C, HpWp), jnp.float32)

    pool_flops = N * C * HpWp * (kh + kw)
    x_hbm = N * C * HW * xbytes

    # ---- Pass 1: global per-channel (shifted) sum / sum-of-squares of the
    # pooled map; when stride > 1 it also emits the pooled tensor.
    out_shapes = [jax.ShapeDtypeStruct((1, C, 1), jnp.float32)] * 3
    out_specs = [chan_spec] * 3
    if emit_pooled:
        out_shapes.append(jax.ShapeDtypeStruct((N, C, HoWo), out_dtype))
        out_specs.append(pooled_spec)

    stats = pl.pallas_call(
        functools.partial(_pool_stats_kernel, emit_pooled=emit_pooled,
                          inv_cnt0=1.0 / float(BN * HoWo), **common),
        out_shape=tuple(out_shapes),
        grid=(nb,),
        in_specs=[x_spec, map_spec, map_spec],
        out_specs=tuple(out_specs),
        scratch_shapes=[pad_scratch],
        compiler_params=pltpu.CompilerParams(
            dimension_semantics=("arbitrary",),
            vmem_limit_bytes=vmem_limit),
        cost_estimate=pl.CostEstimate(
            flops=pool_flops + 6 * N * C * HoWo, transcendentals=0,
            bytes_accessed=x_hbm + (N * C * HoWo * xbytes if emit_pooled else 0)),
    )(x_flat, rcnt, keep)
    if emit_pooled:
        s1, s2, mu0, pooled = stats
    else:
        s1, s2, mu0 = stats

    # Tiny per-channel epilogue in plain JAX: fuse BN into scale / bias.
    count = float(N * HoWo)
    m1 = s1 / count
    mean = mu0 + m1
    var = s2 / count - m1 * m1          # Var(pooled); mu0 shift kills cancellation
    inv = lax.rsqrt(var + eps)
    g = gamma.reshape(1, C, 1).astype(jnp.float32)
    b = beta.reshape(1, C, 1).astype(jnp.float32)
    scale = g * inv
    bias = b - mean * scale

    # ---- Pass 2.
    if emit_pooled:
        # stride > 1: pooled tensor is (sh*sw)x smaller than x, so a trivial
        # lane-dense scale/bias pass beats re-pooling from x.
        out_flat = pl.pallas_call(
            _affine_kernel,
            out_shape=jax.ShapeDtypeStruct((N, C, HoWo), out_dtype),
            grid=(nb,),
            in_specs=[pooled_spec, chan_spec, chan_spec],
            out_specs=pooled_spec,
            compiler_params=pltpu.CompilerParams(
                dimension_semantics=("parallel",),
                vmem_limit_bytes=vmem_limit),
            cost_estimate=pl.CostEstimate(
                flops=2 * N * C * HoWo, transcendentals=0,
                bytes_accessed=2 * N * C * HoWo * xbytes),
        )(pooled, scale, bias)
    else:
        # stride == 1: re-pooling x is cheaper than an HBM round-trip of the
        # (same-sized) pooled tensor.
        out_flat = pl.pallas_call(
            functools.partial(_pool_affine_kernel, **common),
            out_shape=jax.ShapeDtypeStruct((N, C, HoWo), out_dtype),
            grid=(nb,),
            in_specs=[x_spec, map_spec, chan_spec, chan_spec],
            out_specs=pooled_spec,
            scratch_shapes=[pad_scratch],
            compiler_params=pltpu.CompilerParams(
                dimension_semantics=("parallel",),
                vmem_limit_bytes=vmem_limit),
            cost_estimate=pl.CostEstimate(
                flops=pool_flops + 2 * N * C * HoWo, transcendentals=0,
                bytes_accessed=x_hbm + N * C * HoWo * xbytes),
        )(x_flat, rcnt, scale, bias)

    return out_flat.reshape(N, C, Ho, Wo)


def _ref_pool_bn(x, gamma, beta, pool_type, k, s, p, eps=1e-5):
    """Pure-JAX reference (NCHW), mirrors PyTorch PoolBN in training mode."""
    pads = [(0, 0), (0, 0), (p, p), (p, p)]
    if pool_type == "max":
        pooled = lax.reduce_window(x, -jnp.inf, lax.max,
                                   (1, 1, k, k), (1, 1, s, s), pads)
    else:
        ssum = lax.reduce_window(x, 0.0, lax.add,
                                 (1, 1, k, k), (1, 1, s, s), pads)
        cnt = lax.reduce_window(jnp.ones_like(x), 0.0, lax.add,
                                (1, 1, k, k), (1, 1, s, s), pads)
        pooled = ssum / cnt
    mean = pooled.mean(axis=(0, 2, 3), keepdims=True)
    var = pooled.var(axis=(0, 2, 3), keepdims=True)
    g = gamma.reshape(1, -1, 1, 1)
    b = beta.reshape(1, -1, 1, 1)
    return (pooled - mean) / jnp.sqrt(var + eps) * g + b


if __name__ == "__main__":
    # PoolBN(pool_type, C=4, kernel_size, stride, padding, affine=True)
    N, C, H, W = 2, 4, 16, 16

    key = jax.random.PRNGKey(0)
    kx, kg, kb = jax.random.split(key, 3)
    x = jax.random.normal(kx, (N, C, H, W), dtype=jnp.float32)
    gamma = 1.0 + 0.1 * jax.random.normal(kg, (C,), dtype=jnp.float32)
    beta = 0.1 * jax.random.normal(kb, (C,), dtype=jnp.float32)

    ok = True
    configs = [("avg", 3, 1, 1), ("max", 3, 1, 1),   # stride-1 (re-pool path)
               ("avg", 3, 2, 1), ("max", 3, 2, 1),   # stride-2 (emit-pooled path)
               ("avg", 2, 2, 0), ("max", 2, 2, 0)]   # no-padding path
    for pool_type, k, s, p in configs:
        out = pool_bn(x, gamma, beta, pool_type=pool_type,
                      kernel_size=k, stride=s, padding=p)
        out = jax.block_until_ready(out)
        ref = _ref_pool_bn(x, gamma, beta, pool_type, k, s, p)
        Ho = (H + 2 * p - k) // s + 1
        good = (out.shape == (N, C, Ho, Ho)
                and bool(jnp.allclose(out, ref, atol=1e-4, rtol=1e-4)))
        if not good:
            err = float(jnp.max(jnp.abs(out.astype(jnp.float32) - ref)))
            print(f"FAILED {pool_type} k={k} s={s} p={p} max_err={err}")
        ok &= good

    if ok:
        print("KERNEL_OK")
</pallas_src>

<mosaic_0001>
module attributes {stable_mosaic.version = 11 : i64} {
  func.func @_pool_stats_kernel(%arg0: i32, %arg1: memref<2x4x256xf32, #tpu.memory_space<vmem>>, %arg2: memref<1x1x324xf32, #tpu.memory_space<vmem>>, %arg3: memref<1x1x324xf32, #tpu.memory_space<vmem>>, %arg4: memref<1x4x1xf32, #tpu.memory_space<vmem>>, %arg5: memref<1x4x1xf32, #tpu.memory_space<vmem>>, %arg6: memref<1x4x1xf32, #tpu.memory_space<vmem>>, %arg7: memref<2x4x324xf32, #tpu.memory_space<vmem>>) attributes {dimension_semantics = [#tpu.dimension_semantics<arbitrary>], iteration_bounds = array<i64: 1>, scalar_prefetch = 0 : i64, scratch_operands = 1 : i64, tpu.core_type = #tpu.core_type<tc>, window_params = [{transform_indices = @transform_0, window_bounds = array<i64: 2, 4, 256>}, {pipeline_mode = #tpu.pipeline_mode<synchronous>, transform_indices = @transform_1, window_bounds = array<i64: 1, 1, 324>}, {pipeline_mode = #tpu.pipeline_mode<synchronous>, transform_indices = @transform_2, window_bounds = array<i64: 1, 1, 324>}, {pipeline_mode = #tpu.pipeline_mode<synchronous>, transform_indices = @transform_3, window_bounds = array<i64: 1, 4, 1>}, {pipeline_mode = #tpu.pipeline_mode<synchronous>, transform_indices = @transform_4, window_bounds = array<i64: 1, 4, 1>}, {pipeline_mode = #tpu.pipeline_mode<synchronous>, transform_indices = @transform_5, window_bounds = array<i64: 1, 4, 1>}]} {
    %c0_i32 = arith.constant 0 : i32
    %0 = arith.cmpi eq, %arg0, %c0_i32 : i32
    %1 = arith.extui %0 : i1 to i32
    %c0_i32_0 = arith.constant 0 : i32
    %2 = arith.cmpi ne, %1, %c0_i32_0 : i32
    scf.if %2 {
      %cst_94 = arith.constant 0.000000e+00 : f32
      %75 = vector.broadcast %cst_94 : f32 to vector<2x4x324xf32>
      %c0_95 = arith.constant 0 : index
      %c0_96 = arith.constant 0 : index
      %c0_97 = arith.constant 0 : index
      %76 = vector.load %arg7[%c0_95, %c0_96, %c0_97] : memref<2x4x324xf32, #tpu.memory_space<vmem>>, vector<2x4x324xf32>
      tpu.vector_store %arg7[%c0_95, %c0_96, %c0_97], %75 {strides = array<i32>} : memref<2x4x324xf32, #tpu.memory_space<vmem>>, vector<2x4x324xf32>,
    } else {
    }
    %c0 = arith.constant 0 : index
    %c0_1 = arith.constant 0 : index
    %c0_2 = arith.constant 0 : index
    %3 = vector.load %arg1[%c0, %c0_1, %c0_2] : memref<2x4x256xf32, #tpu.memory_space<vmem>>, vector<2x4x16xf32>
    %c0_3 = arith.constant 0 : index
    %c0_4 = arith.constant 0 : index
    %c19 = arith.constant 19 : index
    %4 = vector.load %arg7[%c0_3, %c0_4, %c19] : memref<2x4x324xf32, #tpu.memory_space<vmem>>, vector<2x4x16xf32>
    tpu.vector_store %arg7[%c0_3, %c0_4, %c19], %3 {strides = array<i32>} : memref<2x4x324xf32, #tpu.memory_space<vmem>>, vector<2x4x16xf32>,
    %c0_5 = arith.constant 0 : index
    %c0_6 = arith.constant 0 : index
    %c16 = arith.constant 16 : index
    %5 = vector.load %arg1[%c0_5, %c0_6, %c16] : memref<2x4x256xf32, #tpu.memory_space<vmem>>, vector<2x4x16xf32>
    %c0_7 = arith.constant 0 : index
    %c0_8 = arith.constant 0 : index
    %c37 = arith.constant 37 : index
    %6 = vector.load %arg7[%c0_7, %c0_8, %c37] : memref<2x4x324xf32, #tpu.memory_space<vmem>>, vector<2x4x16xf32>
    tpu.vector_store %arg7[%c0_7, %c0_8, %c37], %5 {strides = array<i32>} : memref<2x4x324xf32, #tpu.memory_space<vmem>>, vector<2x4x16xf32>,
    %c0_9 = arith.constant 0 : index
    %c0_10 = arith.constant 0 : index
    %c32 = arith.constant 32 : index
    %7 = vector.load %arg1[%c0_9, %c0_10, %c32] : memref<2x4x256xf32, #tpu.memory_space<vmem>>, vector<2x4x16xf32>
    %c0_11 = arith.constant 0 : index
    %c0_12 = arith.constant 0 : index
    %c55 = arith.constant 55 : index
    %8 = vector.load %arg7[%c0_11, %c0_12, %c55] : memref<2x4x324xf32, #tpu.memory_space<vmem>>, vector<2x4x16xf32>
    tpu.vector_store %arg7[%c0_11, %c0_12, %c55], %7 {strides = array<i32>} : memref<2x4x324xf32, #tpu.memory_space<vmem>>, vector<2x4x16xf32>,
    %c0_13 = arith.constant 0 : index
    %c0_14 = arith.constant 0 : index
    %c48 = arith.constant 48 : index
    %9 = vector.load %arg1[%c0_13, %c0_14, %c48] : memref<2x4x256xf32, #tpu.memory_space<vmem>>, vector<2x4x16xf32>
    %c0_15 = arith.constant 0 : index
    %c0_16 = arith.constant 0 : index
    %c73 = arith.constant 73 : index
    %10 = vector.load %arg7[%c0_15, %c0_16, %c73] : memref<2x4x324xf32, #tpu.memory_space<vmem>>, vector<2x4x16xf32>
    tpu.vector_store %arg7[%c0_15, %c0_16, %c73], %9 {strides = array<i32>} : memref<2x4x324xf32, #tpu.memory_space<vmem>>, vector<2x4x16xf32>,
    %c0_17 = arith.constant 0 : index
    %c0_18 = arith.constant 0 : index
    %c64 = arith.constant 64 : index
    %11 = vector.load %arg1[%c0_17, %c0_18, %c64] : memref<2x4x256xf32, #tpu.memory_space<vmem>>, vector<2x4x16xf32>
    %c0_19 = arith.constant 0 : index
    %c0_20 = arith.constant 0 : index
    %c91 = arith.constant 91 : index
    %12 = vector.load %arg7[%c0_19, %c0_20, %c91] : memref<2x4x324xf32, #tpu.memory_space<vmem>>, vector<2x4x16xf32>
    tpu.vector_store %arg7[%c0_19, %c0_20, %c91], %11 {strides = array<i32>} : memref<2x4x324xf32, #tpu.memory_space<vmem>>, vector<2x4x16xf32>,
    %c0_21 = arith.constant 0 : index
    %c0_22 = arith.constant 0 : index
    %c80 = arith.constant 80 : index
    %13 = vector.load %arg1[%c0_21, %c0_22, %c80] : memref<2x4x256xf32, #tpu.memory_space<vmem>>, vector<2x4x16xf32>
    %c0_23 = arith.constant 0 : index
    %c0_24 = arith.constant 0 : index
    %c109 = arith.constant 109 : index
    %14 = vector.load %arg7[%c0_23, %c0_24, %c109] : memref<2x4x324xf32, #tpu.memory_space<vmem>>, vector<2x4x16xf32>
    tpu.vector_store %arg7[%c0_23, %c0_24, %c109], %13 {strides = array<i32>} : memref<2x4x324xf32, #tpu.memory_space<vmem>>, vector<2x4x16xf32>,
    %c0_25 = arith.constant 0 : index
    %c0_26 = arith.constant 0 : index
    %c96 = arith.constant 96 : index
    %15 = vector.load %arg1[%c0_25, %c0_26, %c96] : memref<2x4x256xf32, #tpu.memory_space<vmem>>, vector<2x4x16xf32>
    %c0_27 = arith.constant 0 : index
    %c0_28 = arith.constant 0 : index
    %c127 = arith.constant 127 : index
    %16 = vector.load %arg7[%c0_27, %c0_28, %c127] : memref<2x4x324xf32, #tpu.memory_space<vmem>>, vector<2x4x16xf32>
    tpu.vector_store %arg7[%c0_27, %c0_28, %c127], %15 {strides = array<i32>} : memref<2x4x324xf32, #tpu.memory_space<vmem>>, vector<2x4x16xf32>,
    %c0_29 = arith.constant 0 : index
    %c0_30 = arith.constant 0 : index
    %c112 = arith.constant 112 : index
    %17 = vector.load %arg1[%c0_29, %c0_30, %c112] : memref<2x4x256xf32, #tpu.memory_space<vmem>>, vector<2x4x16xf32>
    %c0_31 = arith.constant 0 : index
    %c0_32 = arith.constant 0 : index
    %c145 = arith.constant 145 : index
    %18 = vector.load %arg7[%c0_31, %c0_32, %c145] : memref<2x4x324xf32, #tpu.memory_space<vmem>>, vector<2x4x16xf32>
    tpu.vector_store %arg7[%c0_31, %c0_32, %c145], %17 {strides = array<i32>} : memref<2x4x324xf32, #tpu.memory_space<vmem>>, vector<2x4x16xf32>,
    %c0_33 = arith.constant 0 : index
    %c0_34 = arith.constant 0 : index
    %c128 = arith.constant 128 : index
    %19 = vector.load %arg1[%c0_33, %c0_34, %c128] : memref<2x4x256xf32, #tpu.memory_space<vmem>>, vector<2x4x16xf32>
    %c0_35 = arith.constant 0 : index
    %c0_36 = arith.constant 0 : index
    %c163 = arith.constant 163 : index
    %20 = vector.load %arg7[%c0_35, %c0_36, %c163] : memref<2x4x324xf32, #tpu.memory_space<vmem>>, vector<2x4x16xf32>
    tpu.vector_store %arg7[%c0_35, %c0_36, %c163], %19 {strides = array<i32>} : memref<2x4x324xf32, #tpu.memory_space<vmem>>, vector<2x4x16xf32>,
    %c0_37 = arith.constant 0 : index
    %c0_38 = arith.constant 0 : index
    %c144 = arith.constant 144 : index
    %21 = vector.load %arg1[%c0_37, %c0_38, %c144] : memref<2x4x256xf32, #tpu.memory_space<vmem>>, vector<2x4x16xf32>
    %c0_39 = arith.constant 0 : index
    %c0_40 = arith.constant 0 : index
    %c181 = arith.constant 181 : index
    %22 = vector.load %arg7[%c0_39, %c0_40, %c181] : memref<2x4x324xf32, #tpu.memory_space<vmem>>, vector<2x4x16xf32>
    tpu.vector_store %arg7[%c0_39, %c0_40, %c181], %21 {strides = array<i32>} : memref<2x4x324xf32, #tpu.memory_space<vmem>>, vector<2x4x16xf32>,
    %c0_41 = arith.constant 0 : index
    %c0_42 = arith.constant 0 : index
    %c160 = arith.constant 160 : index
    %23 = vector.load %arg1[%c0_41, %c0_42, %c160] : memref<2x4x256xf32, #tpu.memory_space<vmem>>, vector<2x4x16xf32>
    %c0_43 = arith.constant 0 : index
    %c0_44 = arith.constant 0 : index
    %c199 = arith.constant 199 : index
    %24 = vector.load %arg7[%c0_43, %c0_44, %c199] : memref<2x4x324xf32, #tpu.memory_space<vmem>>, vector<2x4x16xf32>
    tpu.vector_store %arg7[%c0_43, %c0_44, %c199], %23 {strides = array<i32>} : memref<2x4x324xf32, #tpu.memory_space<vmem>>, vector<2x4x16xf32>,
    %c0_45 = arith.constant 0 : index
    %c0_46 = arith.constant 0 : index
    %c176 = arith.constant 176 : index
    %25 = vector.load %arg1[%c0_45, %c0_46, %c176] : memref<2x4x256xf32, #tpu.memory_space<vmem>>, vector<2x4x16xf32>
    %c0_47 = arith.constant 0 : index
    %c0_48 = arith.constant 0 : index
    %c217 = arith.constant 217 : index
    %26 = vector.load %arg7[%c0_47, %c0_48, %c217] : memref<2x4x324xf32, #tpu.memory_space<vmem>>, vector<2x4x16xf32>
    tpu.vector_store %arg7[%c0_47, %c0_48, %c217], %25 {strides = array<i32>} : memref<2x4x324xf32, #tpu.memory_space<vmem>>, vector<2x4x16xf32>,
    %c0_49 = arith.constant 0 : index
    %c0_50 = arith.constant 0 : index
    %c192 = arith.constant 192 : index
    %27 = vector.load %arg1[%c0_49, %c0_50, %c192] : memref<2x4x256xf32, #tpu.memory_space<vmem>>, vector<2x4x16xf32>
    %c0_51 = arith.constant 0 : index
    %c0_52 = arith.constant 0 : index
    %c235 = arith.constant 235 : index
    %28 = vector.load %arg7[%c0_51, %c0_52, %c235] : memref<2x4x324xf32, #tpu.memory_space<vmem>>, vector<2x4x16xf32>
    tpu.vector_store %arg7[%c0_51, %c0_52, %c235], %27 {strides = array<i32>} : memref<2x4x324xf32, #tpu.memory_space<vmem>>, vector<2x4x16xf32>,
    %c0_53 = arith.constant 0 : index
    %c0_54 = arith.constant 0 : index
    %c208 = arith.constant 208 : index
    %29 = vector.load %arg1[%c0_53, %c0_54, %c208] : memref<2x4x256xf32, #tpu.memory_space<vmem>>, vector<2x4x16xf32>
    %c0_55 = arith.constant 0 : index
    %c0_56 = arith.constant 0 : index
    %c253 = arith.constant 253 : index
    %30 = vector.load %arg7[%c0_55, %c0_56, %c253] : memref<2x4x324xf32, #tpu.memory_space<vmem>>, vector<2x4x16xf32>
    tpu.vector_store %arg7[%c0_55, %c0_56, %c253], %29 {strides = array<i32>} : memref<2x4x324xf32, #tpu.memory_space<vmem>>, vector<2x4x16xf32>,
    %c0_57 = arith.constant 0 : index
    %c0_58 = arith.constant 0 : index
    %c224 = arith.constant 224 : index
    %31 = vector.load %arg1[%c0_57, %c0_58, %c224] : memref<2x4x256xf32, #tpu.memory_space<vmem>>, vector<2x4x16xf32>
    %c0_59 = arith.constant 0 : index
    %c0_60 = arith.constant 0 : index
    %c271 = arith.constant 271 : index
    %32 = vector.load %arg7[%c0_59, %c0_60, %c271] : memref<2x4x324xf32, #tpu.memory_space<vmem>>, vector<2x4x16xf32>
    tpu.vector_store %arg7[%c0_59, %c0_60, %c271], %31 {strides = array<i32>} : memref<2x4x324xf32, #tpu.memory_space<vmem>>, vector<2x4x16xf32>,
    %c0_61 = arith.constant 0 : index
    %c0_62 = arith.constant 0 : index
    %c240 = arith.constant 240 : index
    %33 = vector.load %arg1[%c0_61, %c0_62, %c240] : memref<2x4x256xf32, #tpu.memory_space<vmem>>, vector<2x4x16xf32>
    %c0_63 = arith.constant 0 : index
    %c0_64 = arith.constant 0 : index
    %c289 = arith.constant 289 : index
    %34 = vector.load %arg7[%c0_63, %c0_64, %c289] : memref<2x4x324xf32, #tpu.memory_space<vmem>>, vector<2x4x16xf32>
    tpu.vector_store %arg7[%c0_63, %c0_64, %c289], %33 {strides = array<i32>} : memref<2x4x324xf32, #tpu.memory_space<vmem>>, vector<2x4x16xf32>,
    %c0_65 = arith.constant 0 : index
    %c0_66 = arith.constant 0 : index
    %c0_67 = arith.constant 0 : index
    %35 = vector.load %arg7[%c0_65, %c0_66, %c0_67] : memref<2x4x324xf32, #tpu.memory_space<vmem>>, vector<2x4x324xf32>
    %36 = vector.extract_strided_slice %35 {offsets = [0, 0, 0], sizes = [2, 4, 322], strides = [1, 1, 1]} : vector<2x4x324xf32> to vector<2x4x322xf32>
    %37 = vector.extract_strided_slice %35 {offsets = [0, 0, 1], sizes = [2, 4, 322], strides = [1, 1, 1]} : vector<2x4x324xf32> to vector<2x4x322xf32>
    %38 = arith.addf %36, %37 : vector<2x4x322xf32>
    %39 = vector.extract_strided_slice %35 {offsets = [0, 0, 2], sizes = [2, 4, 322], strides = [1, 1, 1]} : vector<2x4x324xf32> to vector<2x4x322xf32>
    %40 = arith.addf %38, %39 : vector<2x4x322xf32>
    %41 = vector.extract_strided_slice %40 {offsets = [0, 0, 0], sizes = [2, 4, 286], strides = [1, 1, 1]} : vector<2x4x322xf32> to vector<2x4x286xf32>
    %42 = vector.extract_strided_slice %40 {offsets = [0, 0, 18], sizes = [2, 4, 286], strides = [1, 1, 1]} : vector<2x4x322xf32> to vector<2x4x286xf32>
    %43 = arith.addf %41, %42 : vector<2x4x286xf32>
    %44 = vector.extract_strided_slice %40 {offsets = [0, 0, 36], sizes = [2, 4, 286], strides = [1, 1, 1]} : vector<2x4x322xf32> to vector<2x4x286xf32>
    %45 = arith.addf %43, %44 : vector<2x4x286xf32>
    %c0_68 = arith.constant 0 : index
    %c0_69 = arith.constant 0 : index
    %c0_70 = arith.constant 0 : index
    %46 = vector.load %arg2[%c0_68, %c0_69, %c0_70] : memref<1x1x324xf32, #tpu.memory_space<vmem>>, vector<1x1x324xf32>
    %47 = vector.extract_strided_slice %46 {offsets = [0, 0, 0], sizes = [1, 1, 286], strides = [1, 1, 1]} : vector<1x1x324xf32> to vector<1x1x286xf32>
    %48 = vector.broadcast %47 : vector<1x1x286xf32> to vector<2x4x286xf32>
    %49 = arith.mulf %45, %48 : vector<2x4x286xf32>
    %c0_71 = arith.constant 0 : index
    %c0_72 = arith.constant 0 : index
    %c0_73 = arith.constant 0 : index
    %50 = vector.load %arg3[%c0_71, %c0_72, %c0_73] : memref<1x1x324xf32, #tpu.memory_space<vmem>>, vector<1x1x324xf32>
    %51 = vector.extract_strided_slice %50 {offsets = [0, 0, 0], sizes = [1, 1, 286], strides = [1, 1, 1]} : vector<1x1x324xf32> to vector<1x1x286xf32>
    %cst = arith.constant 5.000000e-01 : f32
    %52 = vector.broadcast %cst : f32 to vector<1x1x286xf32>
    %53 = arith.cmpf ogt, %51, %52 : vector<1x1x286xf32>
    %c0_i32_74 = arith.constant 0 : i32
    %54 = arith.cmpi eq, %arg0, %c0_i32_74 : i32
    %55 = arith.extui %54 : i1 to i32
    %c0_i32_75 = arith.constant 0 : i32
    %56 = arith.cmpi ne, %55, %c0_i32_75 : i32
    scf.if %56 {
      %cst_94 = arith.constant 0.000000e+00 : f32
      %75 = vector.shape_cast %53 : vector<1x1x286xi1> to vector<1x1x286xi1>
      %76 = vector.broadcast %75 : vector<1x1x286xi1> to vector<2x4x286xi1>
      %77 = vector.broadcast %cst_94 : f32 to vector<2x4x286xf32>
      %78 = arith.select %76, %49, %77 : vector<2x4x286xi1>, vector<2x4x286xf32>
      %cst_95 = arith.constant dense<0.000000e+00> : vector<4xf32>
      %79 = vector.multi_reduction <add>, %78, %cst_95 [0, 2] : vector<2x4x286xf32> to vector<4xf32>
      %80 = vector.shape_cast %79 : vector<4xf32> to vector<1x4x1xf32>
      %cst_96 = arith.constant 0.001953125 : f32
      %81 = vector.broadcast %cst_96 : f32 to vector<1x4x1xf32>
      %82 = arith.mulf %80, %81 : vector<1x4x1xf32>
      %c0_97 = arith.constant 0 : index
      %c0_98 = arith.constant 0 : index
      %c0_99 = arith.constant 0 : index
      %83 = vector.load %arg6[%c0_97, %c0_98, %c0_99] : memref<1x4x1xf32, #tpu.memory_space<vmem>>, vector<1x4x1xf32>
      tpu.vector_store %arg6[%c0_97, %c0_98, %c0_99], %82 {strides = array<i32>} : memref<1x4x1xf32, #tpu.memory_space<vmem>>, vector<1x4x1xf32>,
      %cst_100 = arith.constant 0.000000e+00 : f32
      %84 = vector.broadcast %cst_100 : f32 to vector<1x4x1xf32>
      %c0_101 = arith.constant 0 : index
      %c0_102 = arith.constant 0 : index
      %c0_103 = arith.constant 0 : index
      %85 = vector.load %arg4[%c0_101, %c0_102, %c0_103] : memref<1x4x1xf32, #tpu.memory_space<vmem>>, vector<1x4x1xf32>
      tpu.vector_store %arg4[%c0_101, %c0_102, %c0_103], %84 {strides = array<i32>} : memref<1x4x1xf32, #tpu.memory_space<vmem>>, vector<1x4x1xf32>,
      %cst_104 = arith.constant 0.000000e+00 : f32
      %86 = vector.broadcast %cst_104 : f32 to vector<1x4x1xf32>
      %c0_105 = arith.constant 0 : index
      %c0_106 = arith.constant 0 : index
      %c0_107 = arith.constant 0 : index
      %87 = vector.load %arg5[%c0_105, %c0_106, %c0_107] : memref<1x4x1xf32, #tpu.memory_space<vmem>>, vector<1x4x1xf32>
      tpu.vector_store %arg5[%c0_105, %c0_106, %c0_107], %86 {strides = array<i32>} : memref<1x4x1xf32, #tpu.memory_space<vmem>>, vector<1x4x1xf32>,
    } else {
    }
    %c0_76 = arith.constant 0 : index
    %c0_77 = arith.constant 0 : index
    %c0_78 = arith.constant 0 : index
    %57 = vector.load %arg6[%c0_76, %c0_77, %c0_78] : memref<1x4x1xf32, #tpu.memory_space<vmem>>, vector<1x4x1xf32>
    %58 = vector.broadcast %57 : vector<1x4x1xf32> to vector<2x4x286xf32>
    %59 = arith.subf %49, %58 : vector<2x4x286xf32>
    %cst_79 = arith.constant 0.000000e+00 : f32
    %60 = vector.shape_cast %53 : vector<1x1x286xi1> to vector<1x1x286xi1>
    %61 = vector.broadcast %60 : vector<1x1x286xi1> to vector<2x4x286xi1>
    %62 = vector.broadcast %cst_79 : f32 to vector<2x4x286xf32>
    %63 = arith.select %61, %59, %62 : vector<2x4x286xi1>, vector<2x4x286xf32>
    %c0_80 = arith.constant 0 : index
    %c0_81 = arith.constant 0 : index
    %c0_82 = arith.constant 0 : index
    %64 = vector.load %arg4[%c0_80, %c0_81, %c0_82] : memref<1x4x1xf32, #tpu.memory_space<vmem>>, vector<1x4x1xf32>
    %cst_83 = arith.constant dense<0.000000e+00> : vector<4xf32>
    %65 = vector.multi_reduction <add>, %63, %cst_83 [0, 2] : vector<2x4x286xf32> to vector<4xf32>
    %66 = vector.shape_cast %65 : vector<4xf32> to vector<1x4x1xf32>
    %67 = arith.addf %64, %66 : vector<1x4x1xf32>
    %c0_84 = arith.constant 0 : index
    %c0_85 = arith.constant 0 : index
    %c0_86 = arith.constant 0 : index
    %68 = vector.load %arg4[%c0_84, %c0_85, %c0_86] : memref<1x4x1xf32, #tpu.memory_space<vmem>>, vector<1x4x1xf32>
    tpu.vector_store %arg4[%c0_84, %c0_85, %c0_86], %67 {strides = array<i32>} : memref<1x4x1xf32, #tpu.memory_space<vmem>>, vector<1x4x1xf32>,
    %c0_87 = arith.constant 0 : index
    %c0_88 = arith.constant 0 : index
    %c0_89 = arith.constant 0 : index
    %69 = vector.load %arg5[%c0_87, %c0_88, %c0_89] : memref<1x4x1xf32, #tpu.memory_space<vmem>>, vector<1x4x1xf32>
    %70 = arith.mulf %63, %63 : vector<2x4x286xf32>
    %cst_90 = arith.constant dense<0.000000e+00> : vector<4xf32>
    %71 = vector.multi_reduction <add>, %70, %cst_90 [0, 2] : vector<2x4x286xf32> to vector<4xf32>
    %72 = vector.shape_cast %71 : vector<4xf32> to vector<1x4x1xf32>
    %73 = arith.addf %69, %72 : vector<1x4x1xf32>
    %c0_91 = arith.constant 0 : index
    %c0_92 = arith.constant 0 : index
    %c0_93 = arith.constant 0 : index
    %74 = vector.load %arg5[%c0_91, %c0_92, %c0_93] : memref<1x4x1xf32, #tpu.memory_space<vmem>>, vector<1x4x1xf32>
    tpu.vector_store %arg5[%c0_91, %c0_92, %c0_93], %73 {strides = array<i32>} : memref<1x4x1xf32, #tpu.memory_space<vmem>>, vector<1x4x1xf32>,
    return
  }
  func.func @transform_0(%arg0: i32) -> (i32, i32, i32) {
    %c0_i32 = arith.constant 0 : i32
    %c0_i32_0 = arith.constant 0 : i32
    %c0_i32_1 = arith.constant 0 : i32
    return %arg0, %c0_i32, %c0_i32_0 : i32, i32, i32
  }
  func.func @transform_1(%arg0: i32) -> (i32, i32, i32) {
    %c0_i32 = arith.constant 0 : i32
    %c0_i32_0 = arith.constant 0 : i32
    %c0_i32_1 = arith.constant 0 : i32
    %c0_i32_2 = arith.constant 0 : i32
    return %c0_i32, %c0_i32_0, %c0_i32_1 : i32, i32, i32
  }
  func.func @transform_2(%arg0: i32) -> (i32, i32, i32) {
    %c0_i32 = arith.constant 0 : i32
    %c0_i32_0 = arith.constant 0 : i32
    %c0_i32_1 = arith.constant 0 : i32
    %c0_i32_2 = arith.constant 0 : i32
    return %c0_i32, %c0_i32_0, %c0_i32_1 : i32, i32, i32
  }
  func.func @transform_3(%arg0: i32) -> (i32, i32, i32) {
    %c0_i32 = arith.constant 0 : i32
    %c0_i32_0 = arith.constant 0 : i32
    %c0_i32_1 = arith.constant 0 : i32
    %c0_i32_2 = arith.constant 0 : i32
    return %c0_i32, %c0_i32_0, %c0_i32_1 : i32, i32, i32
  }
  func.func @transform_4(%arg0: i32) -> (i32, i32, i32) {
    %c0_i32 = arith.constant 0 : i32
    %c0_i32_0 = arith.constant 0 : i32
    %c0_i32_1 = arith.constant 0 : i32
    %c0_i32_2 = arith.constant 0 : i32
    return %c0_i32, %c0_i32_0, %c0_i32_1 : i32, i32, i32
  }
  func.func @transform_5(%arg0: i32) -> (i32, i32, i32) {
    %c0_i32 = arith.constant 0 : i32
    %c0_i32_0 = arith.constant 0 : i32
    %c0_i32_1 = arith.constant 0 : i32
    %c0_i32_2 = arith.constant 0 : i32
    return %c0_i32, %c0_i32_0, %c0_i32_1 : i32, i32, i32
  }
}

</mosaic_0001>

<llo_original>
// kernel: tpu_custom_call.1
$region0: #{tpu_custom_call.1}
  #allocation0 [shape = 'u32[]', space=smem, size = 0x4, offset = 0x4, fixed_abs, tag = 'smem constant byte address 0x4 - core index']
  #allocation1 [shape = 'u32[72,128]{1,0:T(1,128)}', space=vmem, size = 0x9000, scoped, tag = 'internal scratch']
  #allocation2 [shape = 'f32[2,4,324]{2,1,0:T(4,128)}', space=vmem, size = 0x3000, scoped, tag = 'scratch operand']
  %s0 = inlined_call_operand.hbm [shape: f32[2,4,256], index: 0, kind: input, shape index: {}]
  %s1 = inlined_call_operand.hbm [shape: f32[1,1,324], index: 1, kind: input, shape index: {}]
  %s2 = inlined_call_operand.hbm [shape: f32[1,1,324], index: 2, kind: input, shape index: {}]
  %s3 = inlined_call_operand.vmem [shape: f32[1,4,1], index: 3, kind: output, shape index: {0}]
  %s4 = inlined_call_operand.vmem [shape: f32[1,4,1], index: 4, kind: output, shape index: {1}]
  %s5 = inlined_call_operand.vmem [shape: f32[1,4,1], index: 5, kind: output, shape index: {2}]
  %6 = xla_tuple %s3, %s4, %s5
  %s7 = sld [smem:[#allocation0]]
  $region58: #{tpu_custom_call.1} parent=0
    _
  %s9 = ssub.s32 1, %s7
  %s10 = scalar_select 0, %s9, %s7
  $region1: #{tpu_custom_call.1} parent=0
    #allocation3 [shape = 'u8[8192]{0}', space=vmem, size = 0x2000, scoped, tag = 'input window, operand 0, single buffered']
    #allocation4 [shape = 's32[1]{0}', space=sflag, size = 0x4, scoped, tag = 'scoped memory for tpu_custom_call.1']
    #allocation5 [shape = 'u8[1536]{0}', space=vmem, size = 0x800, scoped, tag = 'input window, operand 1, single buffered']
    #allocation6 [shape = 's32[1]{0}', space=sflag, size = 0x4, scoped, tag = 'scoped memory for tpu_custom_call.1']
    #allocation7 [shape = 'u8[1536]{0}', space=vmem, size = 0x800, scoped, tag = 'input window, operand 2, single buffered']
    %11 = vsyncpa [#allocation4], 0
    %12 = vsyncpa [#allocation6], 0
    // Predicated region
    $region2: #{tpu_custom_call.1} parent=1 // pred_check
      _
    $region3: #{tpu_custom_call.1} parent=1 // pred_check_branch
      %14 = sbr.rel (0) target = $region5
    $region4: #{tpu_custom_call.1} parent=1 // pred_region
      %16 = vsyncadd [#allocation4], 0
      %s17 = sshll.u32 %s0, 4
      %s18 = int_to_ptr.hbm [resolvable:$true] %s17
      %s19 = sshll.u32 [#allocation3], 4
      %s20 = int_to_ptr.vmem [resolvable:$true] %s19
      %25 = dma.hbm_to_vmem [thread:$0]  %s18, 256, %s20, [#allocation4], 128, 128, 8
    $region5: #{tpu_custom_call.1} parent=1 // pred_fallthru
      _
    // Predicated region
    $region6: #{tpu_custom_call.1} parent=1 // pred_check
      _
    $region7: #{tpu_custom_call.1} parent=1 // pred_check_branch
      %27 = sbr.rel (0) target = $region9
    $region8: #{tpu_custom_call.1} parent=1 // pred_region
      %29 = vsyncadd [#allocation6], 0
      %s31 = sshll.u32 %s1, 4
      %s32 = int_to_ptr.hbm [resolvable:$true] %s31
      %s33 = sshll.u32 [#allocation5], 4
      %s34 = int_to_ptr.vmem [resolvable:$true] %s33
      %36 = dma.hbm_to_vmem [thread:$0]  %s32, 48, %s34, [#allocation6]
    $region9: #{tpu_custom_call.1} parent=1 // pred_fallthru
      _
    // Predicated region
    $region10: #{tpu_custom_call.1} parent=1 // pred_check
      _
    $region11: #{tpu_custom_call.1} parent=1 // pred_check_branch
      %38 = sbr.rel (0) target = $region13
    $region12: #{tpu_custom_call.1} parent=1 // pred_region
      %40 = vsyncadd [#allocation6], 0
      %s42 = sshll.u32 %s2, 4
      %s43 = int_to_ptr.hbm [resolvable:$true] %s42
      %s44 = sshll.u32 [#allocation7], 4
      %s45 = int_to_ptr.vmem [resolvable:$true] %s44
      %47 = dma.hbm_to_vmem [thread:$0]  %s43, 48, %s45, [#allocation6]
    $region13: #{tpu_custom_call.1} parent=1 // pred_fallthru
      _
    // Predicated region
    $region14: #{tpu_custom_call.1} parent=1 // pred_check
      _
    $region15: #{tpu_custom_call.1} parent=1 // pred_check_branch
      %49 = sbr.rel (0) target = $region17
    $region16: #{tpu_custom_call.1} parent=1 // pred_region
      %51 = dma.done [#allocation4], 256
    $region17: #{tpu_custom_call.1} parent=1 // pred_fallthru
      _
    // Predicated region
    $region18: #{tpu_custom_call.1} parent=1 // pred_check
      _
    $region19: #{tpu_custom_call.1} parent=1 // pred_check_branch
      %53 = sbr.rel (0) target = $region21
    $region20: #{tpu_custom_call.1} parent=1 // pred_region
      %55 = dma.done [#allocation6], 48
    $region21: #{tpu_custom_call.1} parent=1 // pred_fallthru
      _
    // Predicated region
    $region22: #{tpu_custom_call.1} parent=1 // pred_check
      _
    $region23: #{tpu_custom_call.1} parent=1 // pred_check_branch
      %57 = sbr.rel (0) target = $region25
    $region24: #{tpu_custom_call.1} parent=1 // pred_region
      %59 = dma.done [#allocation6], 48
    $region25: #{tpu_custom_call.1} parent=1 // pred_fallthru
      _
    %p60 = scmp.eq.s32.totalorder 0, 0
    // Predicated region
    $region26: #{tpu_custom_call.1} parent=1 // pred_check
      %p61 = pneg %p60
    $region27: #{tpu_custom_call.1} parent=1 // pred_check_branch
      %63 = sbr.rel (%p61) target = $region29
    $region28: #{tpu_custom_call.1} parent=1 // pred_region
      %64 = vst [vmem:[#allocation2] sm:$0xff] 0.0
      %vm65 = vcmask 551936
      %66 = vst.msk [vmem:[#allocation2 + $0x8] sm:$0xf] %vm65, 0.0
      %67 = vst [vmem:[#allocation2 + $0xc] sm:$0xff] 0.0
      %68 = vst.msk [vmem:[#allocation2 + $0x14] sm:$0xf] %vm65, 0.0
    $region29: #{tpu_custom_call.1} parent=1 // pred_fallthru
      _
    %v69 = vld [vmem:[#allocation3] sm:$0xf]
    %v70 = vld [vmem:[#allocation3 + $0x8] sm:$0xf]
    %73 = vrot.lane.b32.xlu0 %v69, 19
    %v74 = vpop.permute.xlu0 %73
    %75 = vrot.lane.b32.xlu0 %v70, 19
    %v76 = vpop.permute.xlu0 %75
    %vm79 = vcmask 281752
    %80 = vst.msk [vmem:[#allocation2] sm:$0xf] %vm79, %v74
    %81 = vst.msk [vmem:[#allocation2 + $0xc] sm:$0xf] %vm79, %v76
    %v82 = vld [vmem:[#allocation3] sm:$0xf]
    %v83 = vld [vmem:[#allocation3 + $0x8] sm:$0xf]
    %86 = vrot.lane.b32.xlu0 %v82, 21
    %v87 = vpop.permute.xlu0 %86
    %88 = vrot.lane.b32.xlu0 %v83, 21
    %v89 = vpop.permute.xlu0 %88
    %vm92 = vcmask 429352
    %93 = vst.msk [vmem:[#allocation2] sm:$0xf] %vm92, %v87
    %94 = vst.msk [vmem:[#allocation2 + $0xc] sm:$0xf] %vm92, %v89
    %v95 = vld [vmem:[#allocation3] sm:$0xf]
    %v96 = vld [vmem:[#allocation3 + $0x8] sm:$0xf]
    %99 = vrot.lane.b32.xlu0 %v95, 23
    %v100 = vpop.permute.xlu0 %99
    %101 = vrot.lane.b32.xlu0 %v96, 23
    %v102 = vpop.permute.xlu0 %101
    %vm105 = vcmask 576952
    %106 = vst.msk [vmem:[#allocation2] sm:$0xf] %vm105, %v100
    %107 = vst.msk [vmem:[#allocation2 + $0xc] sm:$0xf] %vm105, %v102
    %v108 = vld [vmem:[#allocation3] sm:$0xf]
    %v109 = vld [vmem:[#allocation3 + $0x8] sm:$0xf]
    %112 = vrot.lane.b32.xlu0 %v108, 25
    %v113 = vpop.permute.xlu0 %112
    %114 = vrot.lane.b32.xlu0 %v109, 25
    %v115 = vpop.permute.xlu0 %114
    %vm118 = vcmask 724552
    %119 = vst.msk [vmem:[#allocation2] sm:$0xf] %vm118, %v113
    %120 = vst.msk [vmem:[#allocation2 + $0xc] sm:$0xf] %vm118, %v115
    %v121 = vld [vmem:[#allocation3] sm:$0xf]
    %v122 = vld [vmem:[#allocation3 + $0x8] sm:$0xf]
    %125 = vrot.lane.b32.xlu0 %v121, 27
    %v126 = vpop.permute.xlu0 %125
    %127 = vrot.lane.b32.xlu0 %v122, 27
    %v128 = vpop.permute.xlu0 %127
    %vm131 = vcmask 872152
    %132 = vst.msk [vmem:[#allocation2] sm:$0xf] %vm131, %v126
    %133 = vst.msk [vmem:[#allocation2 + $0xc] sm:$0xf] %vm131, %v128
    %v134 = vld [vmem:[#allocation3] sm:$0xf]
    %v135 = vld [vmem:[#allocation3 + $0x8] sm:$0xf]
    %138 = vrot.lane.b32.xlu0 %v134, 29
    %v139 = vpop.permute.xlu0 %138
    %140 = vrot.lane.b32.xlu0 %v135, 29
    %v141 = vpop.permute.xlu0 %140
    %vm144 = vcmask 1019752
    %145 = vst.msk [vmem:[#allocation2] sm:$0xf] %vm144, %v139
    %146 = vst.msk [vmem:[#allocation2 + $0xc] sm:$0xf] %vm144, %v141
    %v147 = vld [vmem:[#allocation3] sm:$0xf]
    %v148 = vld [vmem:[#allocation3 + $0x8] sm:$0xf]
    %151 = vrot.lane.b32.xlu0 %v147, 31
    %v152 = vpop.permute.xlu0 %151
    %153 = vrot.lane.b32.xlu0 %v148, 31
    %v154 = vpop.permute.xlu0 %153
    %v155 = vrot.slane %v152, 4
    %v156 = vrot.slane %v154, 4
    %vm157 = vcmask 252928
    %v158 = vsel %vm157, %v155, %v152
    %v159 = vsel %vm157, %v156, %v154
    %vm162 = vcmask 1044472
    %vm163 = vcmask 121860
    %vm164 = vmor %vm163, %vm162
    %165 = vst.msk [vmem:[#allocation2] sm:$0xff] %vm164, %v158
    %166 = vst.msk [vmem:[#allocation2 + $0xc] sm:$0xff] %vm164, %v159
    %v167 = vld [vmem:[#allocation3] sm:$0xf]
    %v168 = vld [vmem:[#allocation3 + $0x8] sm:$0xf]
    %171 = vrot.lane.b32.xlu0 %v167, 33
    %v172 = vpop.permute.xlu0 %171
    %173 = vrot.lane.b32.xlu0 %v168, 33
    %v174 = vpop.permute.xlu0 %173
    %vm177 = vcmask 265352
    %178 = vst.msk [vmem:[#allocation2 + $0x4] sm:$0xf] %vm177, %v172
    %179 = vst.msk [vmem:[#allocation2 + $0x10] sm:$0xf] %vm177, %v174
    %v180 = vld [vmem:[#allocation3 + $0x4] sm:$0xf]
    %v181 = vld [vmem:[#allocation3 + $0xc] sm:$0xf]
    %184 = vrot.lane.b32.xlu0 %v180, 35
    %v185 = vpop.permute.xlu0 %184
    %186 = vrot.lane.b32.xlu0 %v181, 35
    %v187 = vpop.permute.xlu0 %186
    %vm190 = vcmask 412952
    %191 = vst.msk [vmem:[#allocation2 + $0x4] sm:$0xf] %vm190, %v185
    %192 = vst.msk [vmem:[#allocation2 + $0x10] sm:$0xf] %vm190, %v187
    %v193 = vld [vmem:[#allocation3 + $0x4] sm:$0xf]
    %v194 = vld [vmem:[#allocation3 + $0xc] sm:$0xf]
    %197 = vrot.lane.b32.xlu0 %v193, 37
    %v198 = vpop.permute.xlu0 %197
    %199 = vrot.lane.b32.xlu0 %v194, 37
    %v200 = vpop.permute.xlu0 %199
    %vm203 = vcmask 560552
    %204 = vst.msk [vmem:[#allocation2 + $0x4] sm:$0xf] %vm203, %v198
    %205 = vst.msk [vmem:[#allocation2 + $0x10] sm:$0xf] %vm203, %v200
    %v206 = vld [vmem:[#allocation3 + $0x4] sm:$0xf]
    %v207 = vld [vmem:[#allocation3 + $0xc] sm:$0xf]
    %210 = vrot.lane.b32.xlu0 %v206, 39
    %v211 = vpop.permute.xlu0 %210
    %212 = vrot.lane.b32.xlu0 %v207, 39
    %v213 = vpop.permute.xlu0 %212
    %vm216 = vcmask 708152
    %217 = vst.msk [vmem:[#allocation2 + $0x4] sm:$0xf] %vm216, %v211
    %218 = vst.msk [vmem:[#allocation2 + $0x10] sm:$0xf] %vm216, %v213
    %v219 = vld [vmem:[#allocation3 + $0x4] sm:$0xf]
    %v220 = vld [vmem:[#allocation3 + $0xc] sm:$0xf]
    %223 = vrot.lane.b32.xlu0 %v219, 41
    %v224 = vpop.permute.xlu0 %223
    %225 = vrot.lane.b32.xlu0 %v220, 41
    %v226 = vpop.permute.xlu0 %225
    %vm229 = vcmask 855752
    %230 = vst.msk [vmem:[#allocation2 + $0x4] sm:$0xf] %vm229, %v224
    %231 = vst.msk [vmem:[#allocation2 + $0x10] sm:$0xf] %vm229, %v226
    %v232 = vld [vmem:[#allocation3 + $0x4] sm:$0xf]
    %v233 = vld [vmem:[#allocation3 + $0xc] sm:$0xf]
    %236 = vrot.lane.b32.xlu0 %v232, 43
    %v237 = vpop.permute.xlu0 %236
    %238 = vrot.lane.b32.xlu0 %v233, 43
    %v239 = vpop.permute.xlu0 %238
    %vm242 = vcmask 1003352
    %243 = vst.msk [vmem:[#allocation2 + $0x4] sm:$0xf] %vm242, %v237
    %244 = vst.msk [vmem:[#allocation2 + $0x10] sm:$0xf] %vm242, %v239
    %v245 = vld [vmem:[#allocation3 + $0x4] sm:$0xf]
    %v246 = vld [vmem:[#allocation3 + $0xc] sm:$0xf]
    %249 = vrot.lane.b32.xlu0 %v245, 45
    %v250 = vpop.permute.xlu0 %249
    %251 = vrot.lane.b32.xlu0 %v246, 45
    %v252 = vpop.permute.xlu0 %251
    %v253 = vrot.slane %v250, 4
    %v254 = vrot.slane %v252, 4
    %vm255 = vcmask 367616
    %v256 = vsel %vm255, %v253, %v250
    %v257 = vsel %vm255, %v254, %v252
    %vm260 = vcmask 1044456
    %vm261 = vcmask 105476
    %vm262 = vmor %vm261, %vm260
    %263 = vst.msk [vmem:[#allocation2 + $0x4] sm:$0xff] %vm262, %v256
    %264 = vst.msk [vmem:[#allocation2 + $0x10] sm:$0xff] %vm262, %v257
    %v265 = vld [vmem:[#allocation3 + $0x4] sm:$0xf]
    %v266 = vld [vmem:[#allocation3 + $0xc] sm:$0xf]
    %269 = vrot.lane.b32.xlu0 %v265, 47
    %v270 = vpop.permute.xlu0 %269
    %271 = vrot.lane.b32.xlu0 %v266, 47
    %v272 = vpop.permute.xlu0 %271
    %vm275 = vcmask 248952
    %276 = vst.msk [vmem:[#allocation2 + $0x8] sm:$0xf] %vm275, %v270
    %277 = vst.msk [vmem:[#allocation2 + $0x14] sm:$0xf] %vm275, %v272
    %v278 = vld [vmem:[#allocation3 + $0x4] sm:$0xf]
    %v279 = vld [vmem:[#allocation3 + $0xc] sm:$0xf]
    %282 = vrot.lane.b32.xlu0 %v278, 49
    %v283 = vpop.permute.xlu0 %282
    %284 = vrot.lane.b32.xlu0 %v279, 49
    %v285 = vpop.permute.xlu0 %284
    %vm288 = vcmask 396552
    %289 = vst.msk [vmem:[#allocation2 + $0x8] sm:$0xf] %vm288, %v283
    %290 = vst.msk [vmem:[#allocation2 + $0x14] sm:$0xf] %vm288, %v285
    %v291 = vld [vmem:[#allocation2] sm:$0xff]
    %v292 = vld [vmem:[#allocation2 + $0x8] sm:$0xf]
    %v293 = vld [vmem:[#allocation2 + $0xc] sm:$0xff]
    %v294 = vld [vmem:[#allocation2 + $0x14] sm:$0xf]
    %299 = vrot.lane.b32.xlu0 %v291, 127
    %v300 = vpop.permute.xlu0 %299
    %301 = vrot.lane.b32.xlu0 %v292, 127
    %v302 = vpop.permute.xlu0 %301
    %303 = vrot.lane.b32.xlu0 %v293, 127
    %v304 = vpop.permute.xlu0 %303
    %305 = vrot.lane.b32.xlu0 %v294, 127
    %v306 = vpop.permute.xlu0 %305
    %v307 = vrot.slane %v300, 4
    %v308 = vrot.slane %v302, 4
    %v309 = vrot.slane %v304, 4
    %v310 = vrot.slane %v306, 4
    %vm311 = vcmask 1043456
    %v312 = vsel %vm311, %v307, %v308
    %vm313 = vcmask 1039360
    %v314 = vsel %vm313, %v300, %v312
    %v315 = vsel %vm311, %v309, %v310
    %v316 = vsel %vm313, %v304, %v315
    %v321 = vadd.f32 %v291, %v314
    %v322 = vadd.f32 %v292, %v302
    %v323 = vadd.f32 %v293, %v316
    %v324 = vadd.f32 %v294, %v306
    %325 = vrot.lane.b32.xlu0 %v291, 126
    %v326 = vpop.permute.xlu0 %325
    %327 = vrot.lane.b32.xlu0 %v292, 126
    %v328 = vpop.permute.xlu0 %327
    %329 = vrot.lane.b32.xlu0 %v293, 126
    %v330 = vpop.permute.xlu0 %329
    %331 = vrot.lane.b32.xlu0 %v294, 126
    %v332 = vpop.permute.xlu0 %331
    %v333 = vrot.slane %v326, 4
    %v334 = vrot.slane %v328, 4
    %v335 = vrot.slane %v330, 4
    %v336 = vrot.slane %v332, 4
    %v337 = vsel %vm311, %v333, %v334
    %vm338 = vcmask 1031168
    %v339 = vsel %vm338, %v326, %v337
    %v340 = vsel %vm311, %v335, %v336
    %v341 = vsel %vm338, %v330, %v340
    %v346 = vadd.f32 %v321, %v339
    %v347 = vadd.f32 %v322, %v328
    %v348 = vadd.f32 %v323, %v341
    %v349 = vadd.f32 %v324, %v332
    %354 = vrot.lane.b32.xlu0 %v346, 110
    %v355 = vpop.permute.xlu0 %354
    %356 = vrot.lane.b32.xlu0 %v347, 110
    %v357 = vpop.permute.xlu0 %356
    %358 = vrot.lane.b32.xlu0 %v348, 110
    %v359 = vpop.permute.xlu0 %358
    %360 = vrot.lane.b32.xlu0 %v349, 110
    %v361 = vpop.permute.xlu0 %360
    %v362 = vrot.slane %v355, 4
    %v363 = vrot.slane %v357, 4
    %v364 = vrot.slane %v359, 4
    %v365 = vrot.slane %v361, 4
    %v366 = vsel %vm311, %v362, %v363
    %vm367 = vcmask 900096
    %v368 = vsel %vm367, %v355, %v366
    %v369 = vsel %vm311, %v364, %v365
    %v370 = vsel %vm367, %v359, %v369
    %v375 = vadd.f32 %v346, %v368
    %v376 = vadd.f32 %v347, %v357
    %v377 = vadd.f32 %v348, %v370
    %v378 = vadd.f32 %v349, %v361
    %379 = vrot.lane.b32.xlu0 %v346, 92
    %v380 = vpop.permute.xlu0 %379
    %381 = vrot.lane.b32.xlu0 %v347, 92
    %v382 = vpop.permute.xlu0 %381
    %383 = vrot.lane.b32.xlu0 %v348, 92
    %v384 = vpop.permute.xlu0 %383
    %385 = vrot.lane.b32.xlu0 %v349, 92
    %v386 = vpop.permute.xlu0 %385
    %v387 = vrot.slane %v380, 4
    %v388 = vrot.slane %v382, 4
    %v389 = vrot.slane %v384, 4
    %v390 = vrot.slane %v386, 4
    %v391 = vsel %vm311, %v387, %v388
    %vm392 = vcmask 752640
    %v393 = vsel %vm392, %v380, %v391
    %v394 = vsel %vm311, %v389, %v390
    %v395 = vsel %vm392, %v384, %v394
    %v400 = vadd.f32 %v375, %v393
    %v401 = vadd.f32 %v376, %v382
    %v402 = vadd.f32 %v377, %v395
    %v403 = vadd.f32 %v378, %v386
    %v404 = vld [vmem:[#allocation5] sm:$0x7]
    %v406 = vperm.slane %v404, 0
    %v407 = vperm.slane %v404, 1
    %v408 = vperm.slane %v404, 2
    %v410 = vrot.slane %v407, 4
    %v411 = vsel %vm311, %v406, %v410
    %v413 = vmul.f32 %v400, %v411
    %v414 = vmul.f32 %v401, %v408
    %v415 = vmul.f32 %v402, %v411
    %v416 = vmul.f32 %v403, %v408
    %v417 = vld [vmem:[#allocation7] sm:$0x7]
    %vm418 = vcmp.gt.f32.partialorder %v417, 0.5
    // Predicated region
    $region30: #{tpu_custom_call.1} parent=1 // pred_check
      %p419 = pneg %p60
    $region31: #{tpu_custom_call.1} parent=1 // pred_check_branch
      %421 = sbr.rel (%p419) target = $region33
    $region32: #{tpu_custom_call.1} parent=1 // pred_region
      %v422 = vsel %vm418, 1, 0
      %v423 = vperm.slane %v422, 0
      %v424 = vperm.slane %v422, 1
      %v425 = vperm.slane %v422, 2
      %vm426 = vcmp.eq.s32.totalorder %v423, 1
      %vm427 = vcmp.eq.s32.totalorder %v424, 1
      %vm428 = vcmp.eq.s32.totalorder %v425, 1
      %433 = vst [vmem:[#allocation1] ss:$2 sm:$0xff] %v413
      %s434 = scalar_lea.vmem [#allocation1], 16
      %435 = vst [vmem:[%s434] ss:$2 sm:$0xff] %v414
      %v436 = vld.sshfl [vmem:[#allocation1] sm:$0xff pattern:$0x75316420]
      %v437 = vld.sshfl [vmem:[#allocation1 + $0x8] sm:$0xff pattern:$0x75316420]
      %v438 = vld.sshfl [vmem:[#allocation1 + $0x10] sm:$0xff pattern:$0x75316420]
      %s439 = scalar_lea.vmem [#allocation1], 32
      %440 = vst [vmem:[%s439] ss:$2 sm:$0xff] %v415
      %s441 = scalar_lea.vmem [#allocation1], 48
      %442 = vst [vmem:[%s441] ss:$2 sm:$0xff] %v416
      %v443 = vld.sshfl [vmem:[#allocation1 + $0x20] sm:$0xff pattern:$0x75316420]
      %v444 = vld.sshfl [vmem:[#allocation1 + $0x28] sm:$0xff pattern:$0x75316420]
      %v445 = vld.sshfl [vmem:[#allocation1 + $0x30] sm:$0xff pattern:$0x75316420]
      %v452 = vsel %vm426, %v436, 0.0
      %v453 = vsel %vm427, %v437, 0.0
      %v454 = vsel %vm428, %v438, 0.0
      %v455 = vsel %vm426, %v443, 0.0
      %v456 = vsel %vm427, %v444, 0.0
      %v457 = vsel %vm428, %v445, 0.0
      %v458 = vsel %vm311, %v452, 0.0
      %v459 = vsel %vm311, %v453, 0.0
      %v460 = vadd.f32 %v458, %v459
      %vm461 = vcmask 240640
      %v462 = vsel %vm461, %v454, 0.0
      %v463 = vadd.f32 %v460, %v462
      %v464 = vsel %vm311, %v455, 0.0
      %v465 = vadd.f32 %v463, %v464
      %v466 = vsel %vm311, %v456, 0.0
      %v467 = vadd.f32 %v465, %v466
      %v468 = vsel %vm461, %v457, 0.0
      %v469 = vadd.f32 %v467, %v468
      %470 = vadd.xlane.f32.xlu0 %v469
      %v471 = vpop.xlane.xlu0 %470
      %v472 = vmul.f32 %v471, 0.001953125
      %vm473 = vcmask 3072
      %474 = vst.msk [vmem:[%s5] sm:$0xf] %vm473, %v472
      %475 = vst.msk [vmem:[%s3] sm:$0xf] %vm473, 0.0
      %476 = vst.msk [vmem:[%s4] sm:$0xf] %vm473, 0.0
    $region33: #{tpu_custom_call.1} parent=1 // pred_fallthru
      _
    %v477 = vld [vmem:[%s5] sm:$0xf]
    %479 = vset.pattern.permute.xlu0 0
    %480 = vperm.xlu0 %479, %v477
    %v481 = vpop.permute.xlu0 %480
    %v483 = vunpack.c.l.s4 839922192
    %v484 = vunpack.c.0.s8 %v483
    %v485 = vperm.slane %v481, %v484
    %v487 = vsub.f32 %v413, %v485
    %v488 = vsub.f32 %v414, %v485
    %v489 = vsub.f32 %v415, %v485
    %v490 = vsub.f32 %v416, %v485
    %v491 = vsel %vm418, 1, 0
    %v492 = vperm.slane %v491, 0
    %v493 = vperm.slane %v491, 1
    %v494 = vperm.slane %v491, 2
    %vm495 = vcmp.eq.s32.totalorder %v492, 1
    %vm496 = vcmp.eq.s32.totalorder %v493, 1
    %vm497 = vcmp.eq.s32.totalorder %v494, 1
    %502 = vst [vmem:[#allocation1] ss:$2 sm:$0xff] %v487
    %s503 = scalar_lea.vmem [#allocation1], 16
    %504 = vst [vmem:[%s503] ss:$2 sm:$0xff] %v488
    %v505 = vld.sshfl [vmem:[#allocation1] sm:$0xff pattern:$0x75316420]
    %v506 = vld.sshfl [vmem:[#allocation1 + $0x8] sm:$0xff pattern:$0x75316420]
    %v507 = vld.sshfl [vmem:[#allocation1 + $0x10] sm:$0xff pattern:$0x75316420]
    %s508 = scalar_lea.vmem [#allocation1], 32
    %509 = vst [vmem:[%s508] ss:$2 sm:$0xff] %v489
    %s510 = scalar_lea.vmem [#allocation1], 48
    %511 = vst [vmem:[%s510] ss:$2 sm:$0xff] %v490
    %v512 = vld.sshfl [vmem:[#allocation1 + $0x20] sm:$0xff pattern:$0x75316420]
    %v513 = vld.sshfl [vmem:[#allocation1 + $0x28] sm:$0xff pattern:$0x75316420]
    %v514 = vld.sshfl [vmem:[#allocation1 + $0x30] sm:$0xff pattern:$0x75316420]
    %v521 = vsel %vm495, %v505, 0.0
    %v522 = vsel %vm496, %v506, 0.0
    %v523 = vsel %vm497, %v507, 0.0
    %v524 = vsel %vm495, %v512, 0.0
    %v525 = vsel %vm496, %v513, 0.0
    %v526 = vsel %vm497, %v514, 0.0
    %v527 = vld [vmem:[%s3] sm:$0xf]
    %v528 = vsel %vm311, %v521, 0.0
    %v529 = vsel %vm311, %v522, 0.0
    %v530 = vadd.f32 %v528, %v529
    %vm531 = vcmask 240640
    %v532 = vsel %vm531, %v523, 0.0
    %v533 = vadd.f32 %v530, %v532
    %v534 = vsel %vm311, %v524, 0.0
    %v535 = vadd.f32 %v533, %v534
    %v536 = vsel %vm311, %v525, 0.0
    %v537 = vadd.f32 %v535, %v536
    %v538 = vsel %vm531, %v526, 0.0
    %v539 = vadd.f32 %v537, %v538
    %540 = vadd.xlane.f32.xlu0 %v539
    %v541 = vpop.xlane.xlu0 %540
    %v542 = vadd.f32 %v527, %v541
    %vm543 = vcmask 3072
    %544 = vst.msk [vmem:[%s3] sm:$0xf] %vm543, %v542
    %v545 = vld [vmem:[%s4] sm:$0xf]
    %v546 = vmul.f32 %v521, %v521
    %v547 = vmul.f32 %v522, %v522
    %v548 = vmul.f32 %v523, %v523
    %v549 = vmul.f32 %v524, %v524
    %v550 = vmul.f32 %v525, %v525
    %v551 = vmul.f32 %v526, %v526
    %v552 = vsel %vm311, %v546, 0.0
    %v553 = vsel %vm311, %v547, 0.0
    %v554 = vadd.f32 %v552, %v553
    %v555 = vsel %vm531, %v548, 0.0
    %v556 = vadd.f32 %v554, %v555
    %v557 = vsel %vm311, %v549, 0.0
    %v558 = vadd.f32 %v556, %v557
    %v559 = vsel %vm311, %v550, 0.0
    %v560 = vadd.f32 %v558, %v559
    %v561 = vsel %vm531, %v551, 0.0
    %v562 = vadd.f32 %v560, %v561
    %563 = vadd.xlane.f32.xlu0 %v562
    %v564 = vpop.xlane.xlu0 %563
    %v565 = vadd.f32 %v545, %v564
    %566 = vst.msk [vmem:[%s4] sm:$0xf] %vm543, %v565
    // Predicated region
    $region34: #{tpu_custom_call.1} parent=1 // pred_check
      _
    $region35: #{tpu_custom_call.1} parent=1 // pred_check_branch
      %568 = sbr.rel (0) target = $region37
    $region36: #{tpu_custom_call.1} parent=1 // pred_region
      _
    $region37: #{tpu_custom_call.1} parent=1 // pred_fallthru
      _
    // Predicated region
    $region38: #{tpu_custom_call.1} parent=1 // pred_check
      _
    $region39: #{tpu_custom_call.1} parent=1 // pred_check_branch
      %570 = sbr.rel (0) target = $region41
    $region40: #{tpu_custom_call.1} parent=1 // pred_region
      _
    $region41: #{tpu_custom_call.1} parent=1 // pred_fallthru
      _
    // Predicated region
    $region42: #{tpu_custom_call.1} parent=1 // pred_check
      _
    $region43: #{tpu_custom_call.1} parent=1 // pred_check_branch
      %572 = sbr.rel (0) target = $region45
    $region44: #{tpu_custom_call.1} parent=1 // pred_region
      _
    $region45: #{tpu_custom_call.1} parent=1 // pred_fallthru
      _
    // Predicated region
    $region46: #{tpu_custom_call.1} parent=1 // pred_check
      _
    $region47: #{tpu_custom_call.1} parent=1 // pred_check_branch
      %574 = sbr.rel (0) target = $region49
    $region48: #{tpu_custom_call.1} parent=1 // pred_region
      _
    $region49: #{tpu_custom_call.1} parent=1 // pred_fallthru
      _
    // Predicated region
    $region50: #{tpu_custom_call.1} parent=1 // pred_check
      _
    $region51: #{tpu_custom_call.1} parent=1 // pred_check_branch
      %576 = sbr.rel (0) target = $region53
    $region52: #{tpu_custom_call.1} parent=1 // pred_region
      _
    $region53: #{tpu_custom_call.1} parent=1 // pred_fallthru
      _
    // Predicated region
    $region54: #{tpu_custom_call.1} parent=1 // pred_check
      _
    $region55: #{tpu_custom_call.1} parent=1 // pred_check_branch
      %578 = sbr.rel (0) target = $region57
    $region56: #{tpu_custom_call.1} parent=1 // pred_region
      _
    $region57: #{tpu_custom_call.1} parent=1 // pred_fallthru
      _
    %579 = vsyncpa [#allocation4], 1
    %580 = vsyncpa [#allocation6], 1

</llo_original>
